<compile_context>
chip_gen: v7x
topology: tpu7x:2x2x1
jax: 0.10.0
libtpu: 0.0.40
codegen_flags: <defaults>
</compile_context>

<pallas_src>
import functools

import jax
import jax.numpy as jnp
from jax.experimental import pallas as pl
from jax.experimental.pallas import tpu as pltpu


# --------------------------------------------------------------------------- #
# Kernels
# --------------------------------------------------------------------------- #
def _pointwise_kernel(x_ref, w_ref, b_ref, o_ref, *, has_bias, precision):
    # x_ref: (1, C_in, TL)   current input tile
    # w_ref: (1, C_out, C_in) resident weight
    # b_ref: (C_out, 1)       resident bias (ignored when has_bias=False)
    # o_ref: (1, C_out, TL)   lane-dense output tile
    dn = (((1,), (0,)), ((), ()))
    acc = jax.lax.dot_general(w_ref[0], x_ref[0], dn,
                              preferred_element_type=jnp.float32,
                              precision=precision)
    if has_bias:
        acc = acc + b_ref[...].astype(jnp.float32)
    o_ref[0, :, :] = acc.astype(o_ref.dtype)


def _halo_conv_kernel(xc_ref, xn_ref, w_ref, b_ref, o_ref, *,
                      n_taps, dilation, has_bias, precision):
    # xc_ref/xn_ref: (1, C_in, TL) current / next tile of the left-padded input
    # w_ref:         (K, C_out, C_in) resident weight
    # b_ref:         (C_out, 1)       resident bias
    # o_ref:         (1, C_out, TL)
    tl = o_ref.shape[-1]
    # 2*TL window in VMEM: covers the dilated halo of this output tile.
    win = jnp.concatenate([xc_ref[0], xn_ref[0]], axis=-1)     # (C_in, 2*TL)
    dn = (((1,), (0,)), ((), ()))
    acc = jax.lax.dot_general(w_ref[0], win[:, 0:tl], dn,
                              preferred_element_type=jnp.float32,
                              precision=precision)
    for k in range(1, n_taps):                                  # small static unroll
        off = k * dilation
        acc = acc + jax.lax.dot_general(w_ref[k], win[:, off:off + tl], dn,
                                        preferred_element_type=jnp.float32,
                                        precision=precision)
    if has_bias:
        acc = acc + b_ref[...].astype(jnp.float32)
    o_ref[0, :, :] = acc.astype(o_ref.dtype)


# --------------------------------------------------------------------------- #
# Tile selection
# --------------------------------------------------------------------------- #
def _choose_tl(L, B, C_in, C_out, K, dilation, itemsize):
    """Pick the L-tile size.

    Largest lane-dense tile that (a) fits a conservative per-step VMEM budget,
    (b) divides L when possible (no output post-slice copy), (c) contains the
    dilated halo, and (d) leaves >=4 grid steps so 2-TC chips (v7x) can shard.
    """
    halo = dilation * (K - 1)
    n_x = 2 if K > 1 else 1
    # double-buffered pipelined blocks + in-kernel f32 temporaries, bytes/lane
    per_lane = 2 * (n_x * C_in + C_out) * itemsize + (2 * n_x * C_in + C_out) * 4
    cap = (int((8 << 20) // max(per_lane, 1)) // 128) * 128
    min_tl = max(128, -(-halo // 128) * 128) if K > 1 else 128
    cap = max(min(cap, 8192), min_tl)

    if K == 1 and L <= cap:
        tl = L                                 # full-dim block: no pad, no slice
    else:
        divs = [t for t in range(min_tl, cap + 1, 128) if L % t == 0]
        tl = max(divs) if divs else min(cap, max(min_tl, -(-L // 128) * 128))

    # keep both TensorCores busy on 2-TC chips when halving costs nothing
    while (B * pl.cdiv(L, tl) < 4 and tl // 2 >= min_tl
           and (tl // 2) % 128 == 0 and L % (tl // 2) == 0):
        tl //= 2
    return tl


# --------------------------------------------------------------------------- #
# Wrapper
# --------------------------------------------------------------------------- #
def conv1d_same(x, w, b=None, *, dilation=1, block_l=None):
    """PyTorch-style Conv1d forward: conv1d(x, w, padding='same', dilation) + bias.

    x: [B, C_in, L], w: [C_out, C_in, K], b: [C_out] or None -> [B, C_out, L].
    """
    B, C_in, L = x.shape
    C_out, C_in_w, K = w.shape
    assert C_in_w == C_in, (C_in_w, C_in)
    dtype = x.dtype
    itemsize = jnp.dtype(dtype).itemsize
    has_bias = b is not None

    # True-f32 semantics when the caller hands us f32 (mem-bound kernel, so the
    # extra MXU passes are free); bf16 data takes the native bf16 path.
    precision = jax.lax.Precision.HIGHEST if dtype == jnp.float32 else None

    tl = block_l if block_l is not None else _choose_tl(
        L, B, C_in, C_out, K, dilation, itemsize)
    n_l = pl.cdiv(L, tl)
    L_out = n_l * tl

    w_t = jnp.transpose(w, (2, 0, 1)).astype(dtype)          # [K, C_out, C_in]
    bias = (b.reshape(C_out, 1).astype(dtype) if has_bias
            else jnp.zeros((C_out, 1), dtype))

    compiler_params = pltpu.CompilerParams(
        dimension_semantics=("parallel", "parallel"),
        vmem_limit_bytes=32 * 1024 * 1024)

    if K == 1:
        # Pointwise conv: no 'same' padding needed at all.
        x_in = x if L_out == L else jnp.pad(x, ((0, 0), (0, 0), (0, L_out - L)))
        kernel = functools.partial(_pointwise_kernel, has_bias=has_bias,
                                   precision=precision)
        out = pl.pallas_call(
            kernel,
            out_shape=jax.ShapeDtypeStruct((B, C_out, L_out), dtype),
            grid=(B, n_l),
            in_specs=[
                pl.BlockSpec((1, C_in, tl), lambda bb, ll: (bb, 0, ll)),
                pl.BlockSpec((1, C_out, C_in), lambda bb, ll: (0, 0, 0)),  # resident
                pl.BlockSpec((C_out, 1), lambda bb, ll: (0, 0)),           # resident
            ],
            out_specs=pl.BlockSpec((1, C_out, tl), lambda bb, ll: (bb, 0, ll)),
            compiler_params=compiler_params,
        )(x_in, w_t, bias)
    else:
        # 'same' padding; PyTorch puts the extra zero on the right when odd.
        total_pad = dilation * (K - 1)
        pad_l = total_pad // 2
        pad_r = total_pad - pad_l
        assert total_pad <= tl, "dilated halo must fit inside one L tile"
        # One extra tile of right zero padding so the last grid step's (ll+1)
        # neighbor-block (halo) read stays in bounds.
        pad_right = (n_l + 1) * tl - pad_l - L
        assert pad_right >= pad_r
        x_pad = jnp.pad(x, ((0, 0), (0, 0), (pad_l, pad_right)))

        kernel = functools.partial(_halo_conv_kernel, n_taps=K,
                                   dilation=dilation, has_bias=has_bias,
                                   precision=precision)
        out = pl.pallas_call(
            kernel,
            out_shape=jax.ShapeDtypeStruct((B, C_out, L_out), dtype),
            grid=(B, n_l),
            in_specs=[
                pl.BlockSpec((1, C_in, tl), lambda bb, ll: (bb, 0, ll)),      # cur
                pl.BlockSpec((1, C_in, tl), lambda bb, ll: (bb, 0, ll + 1)),  # halo
                pl.BlockSpec((K, C_out, C_in), lambda bb, ll: (0, 0, 0)),     # resident
                pl.BlockSpec((C_out, 1), lambda bb, ll: (0, 0)),              # resident
            ],
            out_specs=pl.BlockSpec((1, C_out, tl), lambda bb, ll: (bb, 0, ll)),
            compiler_params=compiler_params,
        )(x_pad, x_pad, w_t, bias)

    return out if L_out == L else out[:, :, :L]


# --------------------------------------------------------------------------- #
# Pure-JAX reference (port of the PyTorch forward) for verification
# --------------------------------------------------------------------------- #
def reference_conv1d(x, w, b, dilation):
    K = w.shape[-1]
    total = dilation * (K - 1)
    pad_l = total // 2
    pad_r = total - pad_l
    out = jax.lax.conv_general_dilated(
        x, w, window_strides=(1,), padding=[(pad_l, pad_r)],
        rhs_dilation=(dilation,), dimension_numbers=("NCH", "OIH", "NCH"),
        precision=jax.lax.Precision.HIGHEST)
    if b is not None:
        out = out + b.reshape(1, -1, 1)
    return out


if __name__ == "__main__":
    key = jax.random.PRNGKey(0)
    kx, kw, kb, kx2, kw2, kw3 = jax.random.split(key, 6)

    def bf16_exact(a):
        # Round to bf16-representable values so products are exact in f32
        # regardless of the MXU precision path -> tight reference comparison.
        return a.astype(jnp.bfloat16).astype(jnp.float32)

    B, C_in, L = 2, 4, 256

    # Case 1: module defaults — kernel=1 (pointwise), bias=False, dilation=1.
    C_out1 = 8
    x1 = bf16_exact(jax.random.normal(kx, (B, C_in, L), jnp.float32))
    w1 = bf16_exact(jnp.sqrt(1.0 / (C_in * 1)) *             # kaiming_normal scale
                    jax.random.normal(kw, (C_out1, C_in, 1), jnp.float32))
    out1 = jax.block_until_ready(conv1d_same(x1, w1, None, dilation=1))
    ref1 = reference_conv1d(x1, w1, None, 1)
    assert out1.shape == (B, C_out1, L), out1.shape
    assert bool(jnp.allclose(out1, ref1, atol=1e-5, rtol=1e-5))

    # Case 2: kernel=3, dilation=2, bias=True.
    K2, dil2, C_out2 = 3, 2, 6
    x2 = bf16_exact(jax.random.normal(kx2, (B, C_in, L), jnp.float32))
    w2 = bf16_exact(jnp.sqrt(1.0 / (C_in * K2)) *
                    jax.random.normal(kw2, (C_out2, C_in, K2), jnp.float32))
    b2 = bf16_exact(jax.random.normal(kb, (C_out2,), jnp.float32))
    out2 = jax.block_until_ready(conv1d_same(x2, w2, b2, dilation=dil2))
    ref2 = reference_conv1d(x2, w2, b2, dil2)
    assert out2.shape == (B, C_out2, L), out2.shape
    assert bool(jnp.allclose(out2, ref2, atol=1e-5, rtol=1e-5))

    # Case 3: even kernel (asymmetric 'same' padding), kernel=4, dilation=1.
    K3, C_out3 = 4, 4
    w3 = bf16_exact(jnp.sqrt(1.0 / (C_in * K3)) *
                    jax.random.normal(kw3, (C_out3, C_in, K3), jnp.float32))
    out3 = jax.block_until_ready(conv1d_same(x2, w3, None, dilation=1))
    ref3 = reference_conv1d(x2, w3, None, 1)
    assert out3.shape == (B, C_out3, L), out3.shape
    assert bool(jnp.allclose(out3, ref3, atol=1e-5, rtol=1e-5))

    print("KERNEL_OK")
</pallas_src>

<mosaic_0001>
module attributes {stable_mosaic.version = 11 : i64} {
  func.func @_pointwise_kernel(%arg0: i32, %arg1: i32, %arg2: memref<1x4x128xf32, #tpu.memory_space<vmem>>, %arg3: memref<1x8x4xf32, #tpu.memory_space<vmem>>, %arg4: memref<8x1xf32, #tpu.memory_space<vmem>>, %arg5: memref<1x8x128xf32, #tpu.memory_space<vmem>>) attributes {dimension_semantics = [#tpu.dimension_semantics<parallel>, #tpu.dimension_semantics<parallel>], iteration_bounds = array<i64: 2, 2>, scalar_prefetch = 0 : i64, scratch_operands = 0 : i64, tpu.core_type = #tpu.core_type<tc>, window_params = [{transform_indices = @transform_0, window_bounds = array<i64: 1, 4, 128>}, {pipeline_mode = #tpu.pipeline_mode<synchronous>, transform_indices = @transform_1, window_bounds = array<i64: 1, 8, 4>}, {pipeline_mode = #tpu.pipeline_mode<synchronous>, transform_indices = @transform_2, window_bounds = array<i64: 8, 1>}, {transform_indices = @transform_3, window_bounds = array<i64: 1, 8, 128>}]} {
    %c0 = arith.constant 0 : index
    %c0_0 = arith.constant 0 : index
    %c0_1 = arith.constant 0 : index
    %0 = vector.load %arg3[%c0, %c0_0, %c0_1] : memref<1x8x4xf32, #tpu.memory_space<vmem>>, vector<1x8x4xf32>
    %1 = vector.shape_cast %0 : vector<1x8x4xf32> to vector<8x4xf32>
    %c0_2 = arith.constant 0 : index
    %c0_3 = arith.constant 0 : index
    %c0_4 = arith.constant 0 : index
    %2 = vector.load %arg2[%c0_2, %c0_3, %c0_4] : memref<1x4x128xf32, #tpu.memory_space<vmem>>, vector<1x4x128xf32>
    %3 = vector.shape_cast %2 : vector<1x4x128xf32> to vector<4x128xf32>
    %cst = arith.constant dense<0.000000e+00> : vector<8x128xf32>
    %4 = tpu.matmul %1, %3, %cst {dimension_numbers = #tpu.dot_dimension_numbers<[1], [0], [0], [1], [0, 0, 1, 1], [], []>, precision = #tpu.contract_precision<fp32>} : vector<8x4xf32>, vector<4x128xf32>, vector<8x128xf32> -> vector<8x128xf32>
    %c0_5 = arith.constant 0 : index
    %c0_6 = arith.constant 0 : index
    %c0_7 = arith.constant 0 : index
    %5 = vector.load %arg5[%c0_5, %c0_6, %c0_7] : memref<1x8x128xf32, #tpu.memory_space<vmem>>, vector<1x8x128xf32>
    %6 = vector.shape_cast %5 : vector<1x8x128xf32> to vector<8x128xf32>
    %7 = vector.shape_cast %4 : vector<8x128xf32> to vector<1x8x128xf32>
    tpu.vector_store %arg5[%c0_5, %c0_6, %c0_7], %7 {strides = array<i32>} : memref<1x8x128xf32, #tpu.memory_space<vmem>>, vector<1x8x128xf32>,
    return
  }
  func.func @transform_0(%arg0: i32, %arg1: i32) -> (i32, i32, i32) {
    %c0_i32 = arith.constant 0 : i32
    %c0_i32_0 = arith.constant 0 : i32
    return %arg0, %c0_i32, %arg1 : i32, i32, i32
  }
  func.func @transform_1(%arg0: i32, %arg1: i32) -> (i32, i32, i32) {
    %c0_i32 = arith.constant 0 : i32
    %c0_i32_0 = arith.constant 0 : i32
    %c0_i32_1 = arith.constant 0 : i32
    %c0_i32_2 = arith.constant 0 : i32
    return %c0_i32, %c0_i32_0, %c0_i32_1 : i32, i32, i32
  }
  func.func @transform_2(%arg0: i32, %arg1: i32) -> (i32, i32) {
    %c0_i32 = arith.constant 0 : i32
    %c0_i32_0 = arith.constant 0 : i32
    %c0_i32_1 = arith.constant 0 : i32
    return %c0_i32, %c0_i32_0 : i32, i32
  }
  func.func @transform_3(%arg0: i32, %arg1: i32) -> (i32, i32, i32) {
    %c0_i32 = arith.constant 0 : i32
    %c0_i32_0 = arith.constant 0 : i32
    return %arg0, %c0_i32, %arg1 : i32, i32, i32
  }
}

</mosaic_0001>

<llo_original>
// kernel: tpu_custom_call.1
$region0: #{tpu_custom_call.1}
  #allocation0 [shape = 'u32[]', space=smem, size = 0x4, offset = 0x4, fixed_abs, tag = 'smem constant byte address 0x4 - core index']
  #allocation1 [shape = 'u32[144,128]{1,0:T(1,128)}', space=vmem, size = 0x12000, scoped, tag = 'internal scratch']
  %s0 = inlined_call_operand.vmem [shape: f32[2,4,256], index: 0, kind: input, shape index: {}]
  %s1 = inlined_call_operand.vmem [shape: f32[1,8,4], index: 1, kind: input, shape index: {}]
  %s2 = inlined_call_operand.vmem [shape: f32[8,1], index: 2, kind: input, shape index: {}]
  %s3 = inlined_call_operand.hbm [shape: f32[2,8,256], index: 3, kind: output, shape index: {}]
  %s4 = sld [smem:[#allocation0]]
  $region45: #{tpu_custom_call.1} parent=0
    _
  %s6 = ssub.s32 1, %s4
  %s7 = scalar_select 0, %s6, %s4
  $region1: #{tpu_custom_call.1} parent=0
    #allocation2 [shape = 'u8[8192]{0}', space=vmem, size = 0x2000, scoped, tag = 'output window, operand 0']
    #allocation3 [shape = 's32[2]{0}', space=sflag, size = 0x8, scoped, tag = 'scoped memory for tpu_custom_call.1']
    %8 = vsyncpa [#allocation3], 0
    %s9 = scalar_lea.sflag [#allocation3], 1
    %10 = vsyncpa %s9, 0
    loop: start=0, step=1, limit=6
    $region2: #{tpu_custom_call.1} parent=1 // loop_pre_header
      _
    $region3: #{tpu_custom_call.1} parent=1 // loop_header
      %s12 = sphi 0, %s16
      %p13 = scmp.ge.s32.totalorder %s12, 6
      %s19 = sphi 0, %s31
      %s20 = sphi 0, %s27
      %s21 = sphi 0, %s19
      %s22 = sphi 0, %s20
      %s23 = sphi 0, %s21
      %s24 = sphi 0, %s22
      %s36 = sphi 0, %s38
      %s39 = sphi 0, %s36
      %s40 = sphi 0, %s39
      %s56 = sphi 0, %s40
      %s60 = sphi 0, %s60
      %s62 = sphi 0, %s60
      %s63 = sphi 0, %s62
      %s77 = sphi 0, %s63
      %s81 = sphi 0, %s81
      %s83 = sphi 0, %s81
      %s84 = sphi 0, %s83
      %s98 = sphi 0, %s84
      %s106 = sphi 0, %s108
      %s109 = sphi 0, %s106
      %s110 = sphi 0, %s109
      %s126 = sphi 0, %s110
    $region4: #{tpu_custom_call.1} parent=1 // loop_header_branch
      %15 = sbr.rel (%p13) target = $region8
    $region5: #{tpu_custom_call.1} parent=1 // loop_body
      %s17 = ssub.s32 %s12, 1
      %s18 = ssub.s32 %s12, 2
      %s25 = sadd.s32 1, %s20
      %p26 = scmp.ge.s32.totalorder %s25, 2
      %s27 = scalar_select %p26, 0, %s25
      %s28 = sadd.s32 1, %s19
      %s29 = scalar_select %p26, %s28, %s19
      %p30 = scmp.ge.s32.totalorder %s29, 2
      %s31 = scalar_select %p30, 0, %s29
      %s32 = ssub.s32 %s19, %s31
      %s33 = ssub.s32 %s20, %s27
      %s34 = sor.u32 %s32, %s33
      %p35 = scmp.eq.s32.totalorder %s34, 0
      %s37 = sadd.s32 %s36, 1
      %s38 = scalar_select %p35, %s36, %s37
      %p41 = pneg %p35
      %p42 = scmp.eq.s32.totalorder %s12, 3
      %p43 = por %p41, %p42
      %p44 = scmp.ne.s32.totalorder %s36, %s39
      %p45 = scmp.eq.s32.totalorder %s12, 0
      %p46 = por %p44, %p45
      %p47 = scmp.ne.s32.totalorder %s36, %s39
      %p48 = scmp.eq.s32.totalorder %s17, 3
      %p49 = por %p47, %p48
      %p50 = scmp.ne.s32.totalorder %s39, %s40
      %p51 = scmp.eq.s32.totalorder %s17, 0
      %p52 = por %p50, %p51
      %p53 = scmp.ne.s32.totalorder %s39, %s40
      %p54 = scmp.eq.s32.totalorder %s18, 3
      %p55 = por %p53, %p54
      %p57 = scmp.ne.s32.totalorder %s40, %s56
      %p58 = scmp.eq.s32.totalorder %s18, 0
      %p59 = por %p57, %p58
      %s61 = sadd.s32 %s60, 1
      %p64 = scmp.eq.s32.totalorder %s12, 3
      %p65 = scmp.ne.s32.totalorder %s60, %s62
      %p66 = scmp.eq.s32.totalorder %s12, 0
      %p67 = por %p65, %p66
      %p68 = scmp.ne.s32.totalorder %s60, %s62
      %p69 = scmp.eq.s32.totalorder %s17, 3
      %p70 = por %p68, %p69
      %p71 = scmp.ne.s32.totalorder %s62, %s63
      %p72 = scmp.eq.s32.totalorder %s17, 0
      %p73 = por %p71, %p72
      %p74 = scmp.ne.s32.totalorder %s62, %s63
      %p75 = scmp.eq.s32.totalorder %s18, 3
      %p76 = por %p74, %p75
      %p78 = scmp.ne.s32.totalorder %s63, %s77
      %p79 = scmp.eq.s32.totalorder %s18, 0
      %p80 = por %p78, %p79
      %s82 = sadd.s32 %s81, 1
      %p85 = scmp.eq.s32.totalorder %s12, 3
      %p86 = scmp.ne.s32.totalorder %s81, %s83
      %p87 = scmp.eq.s32.totalorder %s12, 0
      %p88 = por %p86, %p87
      %p89 = scmp.ne.s32.totalorder %s81, %s83
      %p90 = scmp.eq.s32.totalorder %s17, 3
      %p91 = por %p89, %p90
      %p92 = scmp.ne.s32.totalorder %s83, %s84
      %p93 = scmp.eq.s32.totalorder %s17, 0
      %p94 = por %p92, %p93
      %p95 = scmp.ne.s32.totalorder %s83, %s84
      %p96 = scmp.eq.s32.totalorder %s18, 3
      %p97 = por %p95, %p96
      %p99 = scmp.ne.s32.totalorder %s84, %s98
      %p100 = scmp.eq.s32.totalorder %s18, 0
      %p101 = por %p99, %p100
      %s102 = ssub.s32 %s19, %s31
      %s103 = ssub.s32 %s20, %s27
      %s104 = sor.u32 %s102, %s103
      %p105 = scmp.eq.s32.totalorder %s104, 0
      %s107 = sadd.s32 %s106, 1
      %s108 = scalar_select %p105, %s106, %s107
      %p111 = pneg %p105
      %p112 = scmp.eq.s32.totalorder %s12, 3
      %p113 = por %p111, %p112
      %p114 = scmp.ne.s32.totalorder %s106, %s109
      %p115 = scmp.eq.s32.totalorder %s12, 0
      %p116 = por %p114, %p115
      %p117 = scmp.ne.s32.totalorder %s106, %s109
      %p118 = scmp.eq.s32.totalorder %s17, 3
      %p119 = por %p117, %p118
      %p120 = scmp.ne.s32.totalorder %s109, %s110
      %p121 = scmp.eq.s32.totalorder %s17, 0
      %p122 = por %p120, %p121
      %p123 = scmp.ne.s32.totalorder %s109, %s110
      %p124 = scmp.eq.s32.totalorder %s18, 3
      %p125 = por %p123, %p124
      %p127 = scmp.ne.s32.totalorder %s110, %s126
      %p128 = scmp.eq.s32.totalorder %s18, 0
      %p129 = por %p127, %p128
      %p130 = scmp.le.s32.totalorder 1, %s12
      %p131 = scmp.lt.s32.totalorder %s12, 5
      %p132 = pnand %p130, %p131
      %p133 = pneg %p132
      // Predicated region
      $region9: #{tpu_custom_call.1} parent=5 // pred_check
        _
      $region10: #{tpu_custom_call.1} parent=5 // pred_check_branch
        %135 = sbr.rel (%p132) target = $region12
      $region11: #{tpu_custom_call.1} parent=5 // pred_region
        %s136 = ssub.s32 %s12, 1
        // Predicated region
        $region13: #{tpu_custom_call.1} parent=11 // pred_check
          %p137 = pneg %p73
        $region14: #{tpu_custom_call.1} parent=11 // pred_check_branch
          %139 = sbr.rel (%p137) target = $region16
        $region15: #{tpu_custom_call.1} parent=11 // pred_region
          _
        $region16: #{tpu_custom_call.1} parent=11 // pred_fallthru
          _
        // Predicated region
        $region17: #{tpu_custom_call.1} parent=11 // pred_check
          %p140 = pneg %p94
        $region18: #{tpu_custom_call.1} parent=11 // pred_check_branch
          %142 = sbr.rel (%p140) target = $region20
        $region19: #{tpu_custom_call.1} parent=11 // pred_region
          _
        $region20: #{tpu_custom_call.1} parent=11 // pred_fallthru
          _
      $region12: #{tpu_custom_call.1} parent=5 // pred_fallthru
        _
      %p143 = scmp.lt.s32.totalorder %s12, 4
      // Predicated region
      $region21: #{tpu_custom_call.1} parent=5 // pred_check
        %p144 = pneg %p143
      $region22: #{tpu_custom_call.1} parent=5 // pred_check_branch
        %146 = sbr.rel (%p144) target = $region24
      $region23: #{tpu_custom_call.1} parent=5 // pred_region
        // Predicated region
        $region25: #{tpu_custom_call.1} parent=23 // pred_check
          %p147 = pneg %p46
        $region26: #{tpu_custom_call.1} parent=23 // pred_check_branch
          %149 = sbr.rel (%p147) target = $region28
        $region27: #{tpu_custom_call.1} parent=23 // pred_region
          %p150 = scmp.lt.s32.totalorder %s19, 1
          %s151 = scalar_select %p150, %s19, 1
          %p152 = scmp.lt.s32.totalorder %s20, 1
          %s153 = scalar_select %p152, %s20, 1
          %s154 = smul.addr %s151, 2
          %s155 = sadd.s32 %s153, %s154
          %s156 = smul.addr %s155, 4
          %s157 = scalar_lea.vmem %s0, %s156
        $region28: #{tpu_custom_call.1} parent=23 // pred_fallthru
          _
      $region24: #{tpu_custom_call.1} parent=5 // pred_fallthru
        _
      %p158 = scmp.le.s32.totalorder 1, %s12
      %p159 = scmp.lt.s32.totalorder %s12, 5
      %p160 = pnand %p158, %p159
      %p161 = pneg %p160
      // Predicated region
      $region29: #{tpu_custom_call.1} parent=5 // pred_check
        _
      $region30: #{tpu_custom_call.1} parent=5 // pred_check_branch
        %163 = sbr.rel (%p160) target = $region32
      $region31: #{tpu_custom_call.1} parent=5 // pred_region
        %s164 = ssub.s32 %s12, 1
        %p165 = scmp.lt.s32.totalorder %s21, 1
        %s166 = scalar_select %p165, %s21, 1
        %p167 = scmp.lt.s32.totalorder %s22, 1
        %s168 = scalar_select %p167, %s22, 1
        %s169 = smul.addr %s166, 2
        %s170 = sadd.s32 %s168, %s169
        %s171 = smul.addr %s170, 4
        %s172 = scalar_lea.vmem %s0, %s171
        %p173 = pneg %p52
        %p174 = pneg %p49
        %p175 = pneg %p73
        %p176 = pneg %p70
        %p177 = pneg %p94
        %p178 = pneg %p91
        %p179 = pneg %p122
        %p180 = pneg %p119
        %s181 = sand.u32 %s109, 1
        %s182 = scalar_lea.sflag [#allocation3], %s181
        %s183 = sand.u32 %s109, 1
        %s184 = smul.addr %s183, 8
        %s185 = scalar_lea.vmem [#allocation2], %s184
        %p186 = scmp.lt.s32.totalorder %s21, 1
        %s187 = scalar_select %p186, %s21, 1
        %p188 = scmp.lt.s32.totalorder %s22, 1
        %s189 = scalar_select %p188, %s22, 1
        %s190 = smul.addr %s187, 2
        %s191 = sadd.s32 %s189, %s190
        %s192 = smul.addr %s191, 4
        %s193 = scalar_lea.vmem %s0, %s192
        %v194 = vld [vmem:[%s1] sm:$0xff]
        %v195 = vld [vmem:[%s193] sm:$0xf]
        %vm196 = vcmask 31744
        %v198 = vsel %vm196, %v194, 0
        %vm200 = vcmask 1043456
        %v202 = vsel %vm200, %v195, 0
        %204 = vmatprep.subr.mxu0 0.0
        %v205 = vand.u32 %v202, 4294901760
        %206 = vmatpush1.msra.mxu0 %v205
        %207 = vmatprep.subr.mxu0 0.0
        %208 = vmatpush1.msra.mxu0 0.0
        %209 = vmatprep.subr.mxu0 0.0
        %210 = vmatpush1.msra.mxu0 0.0
        %211 = vmatprep.subr.mxu0 0.0
        %212 = vmatpush1.msra.mxu0 0.0
        %213 = vmatprep.subr.mxu0 0.0
        %214 = vmatpush1.msra.mxu0 0.0
        %215 = vmatprep.subr.mxu0 0.0
        %216 = vmatpush1.msra.mxu0 0.0
        %217 = vmatprep.subr.mxu0 0.0
        %218 = vmatpush1.msra.mxu0 0.0
        %219 = vmatprep.subr.mxu0 0.0
        %220 = vmatpush1.msra.mxu0 0.0
        %221 = vmatprep.subr.mxu0 0.0
        %222 = vmatpush1.msra.mxu0 0.0
        %223 = vmatprep.subr.mxu0 0.0
        %224 = vmatpush1.msra.mxu0 0.0
        %225 = vmatprep.subr.mxu0 0.0
        %226 = vmatpush1.msra.mxu0 0.0
        %227 = vmatprep.subr.mxu0 0.0
        %228 = vmatpush1.msra.mxu0 0.0
        %229 = vmatprep.subr.mxu0 0.0
        %230 = vmatpush1.msra.mxu0 0.0
        %231 = vmatprep.subr.mxu0 0.0
        %232 = vmatpush1.msra.mxu0 0.0
        %233 = vmatprep.subr.mxu0 0.0
        %234 = vmatpush1.msra.mxu0 0.0
        %235 = vmatprep.subr.mxu0 0.0
        %236 = vmatpush1.msra.mxu0 0.0
        %237 = vmatprep.subr.mxu0 0.0
        %238 = vmatpush1.msra.mxu0 0.0
        %239 = vmatprep.subr.mxu0 0.0
        %240 = vmatpush1.msra.mxu0 0.0
        %241 = vmatprep.subr.mxu0 0.0
        %242 = vmatpush1.msra.mxu0 0.0
        %243 = vmatprep.subr.mxu0 0.0
        %244 = vmatpush1.msra.mxu0 0.0
        %245 = vmatprep.subr.mxu0 0.0
        %246 = vmatpush1.msra.mxu0 0.0
        %247 = vmatprep.subr.mxu0 0.0
        %248 = vmatpush1.msra.mxu0 0.0
        %249 = vmatprep.subr.mxu0 0.0
        %250 = vmatpush1.msra.mxu0 0.0
        %251 = vmatprep.subr.mxu0 0.0
        %252 = vmatpush1.msra.mxu0 0.0
        %253 = vmatprep.subr.mxu0 0.0
        %254 = vmatpush1.msra.mxu0 0.0
        %255 = vmatprep.subr.mxu0 0.0
        %256 = vmatpush1.msra.mxu0 0.0
        %257 = vmatprep.subr.mxu0 0.0
        %258 = vmatpush1.msra.mxu0 0.0
        %259 = vmatprep.subr.mxu0 0.0
        %260 = vmatpush1.msra.mxu0 0.0
        %261 = vmatprep.subr.mxu0 0.0
        %262 = vmatpush1.msra.mxu0 0.0
        %263 = vmatprep.subr.mxu0 0.0
        %264 = vmatpush1.msra.mxu0 0.0
        %265 = vmatprep.subr.mxu0 0.0
        %266 = vmatpush1.msra.mxu0 0.0
        %267 = vmatprep.subr.mxu0 0.0
        %268 = vmatpush1.msra.mxu0 0.0
        %269 = vmatprep.mubr.f32.mxu0 0.0
        %v270 = vand.u32 %v198, 4294901760
        %v271 = vsub.f32 %v198, %v270
        %v272 = vand.u32 %v271, 4294901760
        %v273 = vsub.f32 %v271, %v272
        %v274 = vand.u32 %v273, 4294901760
        %275 = vmatmul.mubr.f32.gmra.mrb[0].mxu0 %v274
        %v276 = vpop.f32.mrb[0].mxu0
        %v277 = vadd.f32 0.0, %v276
        %v278 = vpop.f32.mrb[0].mxu0
        %279 = vdwg.mxu0
        %280 = vmatprep.subr.mxu0 0.0
        %v281 = vand.u32 %v202, 4294901760
        %v282 = vsub.f32 %v202, %v281
        %v283 = vand.u32 %v282, 4294901760
        %v284 = vsub.f32 %v282, %v283
        %v285 = vand.u32 %v284, 4294901760
        %286 = vmatpush1.msra.mxu0 %v285
        %287 = vmatprep.subr.mxu0 0.0
        %288 = vmatpush1.msra.mxu0 0.0
        %289 = vmatprep.subr.mxu0 0.0
        %290 = vmatpush1.msra.mxu0 0.0
        %291 = vmatprep.subr.mxu0 0.0
        %292 = vmatpush1.msra.mxu0 0.0
        %293 = vmatprep.subr.mxu0 0.0
        %294 = vmatpush1.msra.mxu0 0.0
        %295 = vmatprep.subr.mxu0 0.0
        %296 = vmatpush1.msra.mxu0 0.0
        %297 = vmatprep.subr.mxu0 0.0
        %298 = vmatpush1.msra.mxu0 0.0
        %299 = vmatprep.subr.mxu0 0.0
        %300 = vmatpush1.msra.mxu0 0.0
        %301 = vmatprep.subr.mxu0 0.0
        %302 = vmatpush1.msra.mxu0 0.0
        %303 = vmatprep.subr.mxu0 0.0
        %304 = vmatpush1.msra.mxu0 0.0
        %305 = vmatprep.subr.mxu0 0.0
        %306 = vmatpush1.msra.mxu0 0.0
        %307 = vmatprep.subr.mxu0 0.0
        %308 = vmatpush1.msra.mxu0 0.0
        %309 = vmatprep.subr.mxu0 0.0
        %310 = vmatpush1.msra.mxu0 0.0
        %311 = vmatprep.subr.mxu0 0.0
        %312 = vmatpush1.msra.mxu0 0.0
        %313 = vmatprep.subr.mxu0 0.0
        %314 = vmatpush1.msra.mxu0 0.0
        %315 = vmatprep.subr.mxu0 0.0
        %316 = vmatpush1.msra.mxu0 0.0
        %317 = vmatprep.subr.mxu0 0.0
        %318 = vmatpush1.msra.mxu0 0.0
        %319 = vmatprep.subr.mxu0 0.0
        %320 = vmatpush1.msra.mxu0 0.0
        %321 = vmatprep.subr.mxu0 0.0
        %322 = vmatpush1.msra.mxu0 0.0
        %323 = vmatprep.subr.mxu0 0.0
        %324 = vmatpush1.msra.mxu0 0.0
        %325 = vmatprep.subr.mxu0 0.0
        %326 = vmatpush1.msra.mxu0 0.0
        %327 = vmatprep.subr.mxu0 0.0
        %328 = vmatpush1.msra.mxu0 0.0
        %329 = vmatprep.subr.mxu0 0.0
        %330 = vmatpush1.msra.mxu0 0.0
        %331 = vmatprep.subr.mxu0 0.0
        %332 = vmatpush1.msra.mxu0 0.0
        %333 = vmatprep.subr.mxu0 0.0
        %334 = vmatpush1.msra.mxu0 0.0
        %335 = vmatprep.subr.mxu0 0.0
        %336 = vmatpush1.msra.mxu0 0.0
        %337 = vmatprep.subr.mxu0 0.0
        %338 = vmatpush1.msra.mxu0 0.0
        %339 = vmatprep.subr.mxu0 0.0
        %340 = vmatpush1.msra.mxu0 0.0
        %341 = vmatprep.subr.mxu0 0.0
        %342 = vmatpush1.msra.mxu0 0.0
        %343 = vmatprep.subr.mxu0 0.0
        %344 = vmatpush1.msra.mxu0 0.0
        %345 = vmatprep.subr.mxu0 0.0
        %346 = vmatpush1.msra.mxu0 0.0
        %347 = vmatprep.subr.mxu0 0.0
        %348 = vmatpush1.msra.mxu0 0.0
        %349 = vmatprep.mubr.f32.mxu0 0.0
        %v350 = vand.u32 %v198, 4294901760
        %351 = vmatmul.mubr.f32.gmra.mrb[0].mxu0 %v350
        %v352 = vpop.f32.mrb[0].mxu0
        %v353 = vadd.f32 %v277, %v352
        %v354 = vpop.f32.mrb[0].mxu0
        %355 = vdwg.mxu0
        %356 = vmatprep.subr.mxu0 0.0
        %v357 = vand.u32 %v202, 4294901760
        %v358 = vsub.f32 %v202, %v357
        %359 = vmatpush1.msra.mxu0 %v358
        %360 = vmatprep.subr.mxu0 0.0
        %361 = vmatpush1.msra.mxu0 0.0
        %362 = vmatprep.subr.mxu0 0.0
        %363 = vmatpush1.msra.mxu0 0.0
        %364 = vmatprep.subr.mxu0 0.0
        %365 = vmatpush1.msra.mxu0 0.0
        %366 = vmatprep.subr.mxu0 0.0
        %367 = vmatpush1.msra.mxu0 0.0
        %368 = vmatprep.subr.mxu0 0.0
        %369 = vmatpush1.msra.mxu0 0.0
        %370 = vmatprep.subr.mxu0 0.0
        %371 = vmatpush1.msra.mxu0 0.0
        %372 = vmatprep.subr.mxu0 0.0
        %373 = vmatpush1.msra.mxu0 0.0
        %374 = vmatprep.subr.mxu0 0.0
        %375 = vmatpush1.msra.mxu0 0.0
        %376 = vmatprep.subr.mxu0 0.0
        %377 = vmatpush1.msra.mxu0 0.0
        %378 = vmatprep.subr.mxu0 0.0
        %379 = vmatpush1.msra.mxu0 0.0
        %380 = vmatprep.subr.mxu0 0.0
        %381 = vmatpush1.msra.mxu0 0.0
        %382 = vmatprep.subr.mxu0 0.0
        %383 = vmatpush1.msra.mxu0 0.0
        %384 = vmatprep.subr.mxu0 0.0
        %385 = vmatpush1.msra.mxu0 0.0
        %386 = vmatprep.subr.mxu0 0.0
        %387 = vmatpush1.msra.mxu0 0.0
        %388 = vmatprep.subr.mxu0 0.0
        %389 = vmatpush1.msra.mxu0 0.0
        %390 = vmatprep.subr.mxu0 0.0
        %391 = vmatpush1.msra.mxu0 0.0
        %392 = vmatprep.subr.mxu0 0.0
        %393 = vmatpush1.msra.mxu0 0.0
        %394 = vmatprep.subr.mxu0 0.0
        %395 = vmatpush1.msra.mxu0 0.0
        %396 = vmatprep.subr.mxu0 0.0
        %397 = vmatpush1.msra.mxu0 0.0
        %398 = vmatprep.subr.mxu0 0.0
        %399 = vmatpush1.msra.mxu0 0.0
        %400 = vmatprep.subr.mxu0 0.0
        %401 = vmatpush1.msra.mxu0 0.0
        %402 = vmatprep.subr.mxu0 0.0
        %403 = vmatpush1.msra.mxu0 0.0
        %404 = vmatprep.subr.mxu0 0.0
        %405 = vmatpush1.msra.mxu0 0.0
        %406 = vmatprep.subr.mxu0 0.0
        %407 = vmatpush1.msra.mxu0 0.0
        %408 = vmatprep.subr.mxu0 0.0
        %409 = vmatpush1.msra.mxu0 0.0
        %410 = vmatprep.subr.mxu0 0.0
        %411 = vmatpush1.msra.mxu0 0.0
        %412 = vmatprep.subr.mxu0 0.0
        %413 = vmatpush1.msra.mxu0 0.0
        %414 = vmatprep.subr.mxu0 0.0
        %415 = vmatpush1.msra.mxu0 0.0
        %416 = vmatprep.subr.mxu0 0.0
        %417 = vmatpush1.msra.mxu0 0.0
        %418 = vmatprep.subr.mxu0 0.0
        %419 = vmatpush1.msra.mxu0 0.0
        %420 = vmatprep.subr.mxu0 0.0
        %421 = vmatpush1.msra.mxu0 0.0
        %422 = vmatprep.mubr.f32.mxu0 0.0
        %v423 = vand.u32 %v198, 4294901760
        %v424 = vsub.f32 %v198, %v423
        %425 = vmatmul.mubr.f32.gmra.mrb[0].mxu0 %v424
        %v426 = vpop.f32.mrb[0].mxu0
        %v427 = vadd.f32 %v353, %v426
        %v428 = vpop.f32.mrb[0].mxu0
        %429 = vdwg.mxu0
        %430 = vmatprep.subr.mxu0 0.0
        %v431 = vand.u32 %v202, 4294901760
        %432 = vmatpush1.msra.mxu0 %v431
        %433 = vmatprep.subr.mxu0 0.0
        %434 = vmatpush1.msra.mxu0 0.0
        %435 = vmatprep.subr.mxu0 0.0
        %436 = vmatpush1.msra.mxu0 0.0
        %437 = vmatprep.subr.mxu0 0.0
        %438 = vmatpush1.msra.mxu0 0.0
        %439 = vmatprep.subr.mxu0 0.0
        %440 = vmatpush1.msra.mxu0 0.0
        %441 = vmatprep.subr.mxu0 0.0
        %442 = vmatpush1.msra.mxu0 0.0
        %443 = vmatprep.subr.mxu0 0.0
        %444 = vmatpush1.msra.mxu0 0.0
        %445 = vmatprep.subr.mxu0 0.0
        %446 = vmatpush1.msra.mxu0 0.0
        %447 = vmatprep.subr.mxu0 0.0
        %448 = vmatpush1.msra.mxu0 0.0
        %449 = vmatprep.subr.mxu0 0.0
        %450 = vmatpush1.msra.mxu0 0.0
        %451 = vmatprep.subr.mxu0 0.0
        %452 = vmatpush1.msra.mxu0 0.0
        %453 = vmatprep.subr.mxu0 0.0
        %454 = vmatpush1.msra.mxu0 0.0
        %455 = vmatprep.subr.mxu0 0.0
        %456 = vmatpush1.msra.mxu0 0.0
        %457 = vmatprep.subr.mxu0 0.0
        %458 = vmatpush1.msra.mxu0 0.0
        %459 = vmatprep.subr.mxu0 0.0
        %460 = vmatpush1.msra.mxu0 0.0
        %461 = vmatprep.subr.mxu0 0.0
        %462 = vmatpush1.msra.mxu0 0.0
        %463 = vmatprep.subr.mxu0 0.0
        %464 = vmatpush1.msra.mxu0 0.0
        %465 = vmatprep.subr.mxu0 0.0
        %466 = vmatpush1.msra.mxu0 0.0
        %467 = vmatprep.subr.mxu0 0.0
        %468 = vmatpush1.msra.mxu0 0.0
        %469 = vmatprep.subr.mxu0 0.0
        %470 = vmatpush1.msra.mxu0 0.0
        %471 = vmatprep.subr.mxu0 0.0
        %472 = vmatpush1.msra.mxu0 0.0
        %473 = vmatprep.subr.mxu0 0.0
        %474 = vmatpush1.msra.mxu0 0.0
        %475 = vmatprep.subr.mxu0 0.0
        %476 = vmatpush1.msra.mxu0 0.0
        %477 = vmatprep.subr.mxu0 0.0
        %478 = vmatpush1.msra.mxu0 0.0
        %479 = vmatprep.subr.mxu0 0.0
        %480 = vmatpush1.msra.mxu0 0.0
        %481 = vmatprep.subr.mxu0 0.0
        %482 = vmatpush1.msra.mxu0 0.0
        %483 = vmatprep.subr.mxu0 0.0
        %484 = vmatpush1.msra.mxu0 0.0
        %485 = vmatprep.subr.mxu0 0.0
        %486 = vmatpush1.msra.mxu0 0.0
        %487 = vmatprep.subr.mxu0 0.0
        %488 = vmatpush1.msra.mxu0 0.0
        %489 = vmatprep.subr.mxu0 0.0
        %490 = vmatpush1.msra.mxu0 0.0
        %491 = vmatprep.subr.mxu0 0.0
        %492 = vmatpush1.msra.mxu0 0.0
        %493 = vmatprep.subr.mxu0 0.0
        %494 = vmatpush1.msra.mxu0 0.0
        %495 = vmatprep.mubr.f32.mxu0 0.0
        %v496 = vand.u32 %v198, 4294901760
        %v497 = vsub.f32 %v198, %v496
        %v498 = vand.u32 %v497, 4294901760
        %499 = vmatmul.mubr.f32.gmra.mrb[0].mxu0 %v498
        %v500 = vpop.f32.mrb[0].mxu0
        %v501 = vadd.f32 %v427, %v500
        %v502 = vpop.f32.mrb[0].mxu0
        %503 = vdwg.mxu0
        %504 = vmatprep.subr.mxu0 0.0
        %v505 = vand.u32 %v202, 4294901760
        %v506 = vsub.f32 %v202, %v505
        %v507 = vand.u32 %v506, 4294901760
        %508 = vmatpush1.msra.mxu0 %v507
        %509 = vmatprep.subr.mxu0 0.0
        %510 = vmatpush1.msra.mxu0 0.0
        %511 = vmatprep.subr.mxu0 0.0
        %512 = vmatpush1.msra.mxu0 0.0
        %513 = vmatprep.subr.mxu0 0.0
        %514 = vmatpush1.msra.mxu0 0.0
        %515 = vmatprep.subr.mxu0 0.0
        %516 = vmatpush1.msra.mxu0 0.0
        %517 = vmatprep.subr.mxu0 0.0
        %518 = vmatpush1.msra.mxu0 0.0
        %519 = vmatprep.subr.mxu0 0.0
        %520 = vmatpush1.msra.mxu0 0.0
        %521 = vmatprep.subr.mxu0 0.0
        %522 = vmatpush1.msra.mxu0 0.0
        %523 = vmatprep.subr.mxu0 0.0
        %524 = vmatpush1.msra.mxu0 0.0
        %525 = vmatprep.subr.mxu0 0.0
        %526 = vmatpush1.msra.mxu0 0.0
        %527 = vmatprep.subr.mxu0 0.0
        %528 = vmatpush1.msra.mxu0 0.0
        %529 = vmatprep.subr.mxu0 0.0
        %530 = vmatpush1.msra.mxu0 0.0
        %531 = vmatprep.subr.mxu0 0.0
        %532 = vmatpush1.msra.mxu0 0.0
        %533 = vmatprep.subr.mxu0 0.0
        %534 = vmatpush1.msra.mxu0 0.0
        %535 = vmatprep.subr.mxu0 0.0
        %536 = vmatpush1.msra.mxu0 0.0
        %537 = vmatprep.subr.mxu0 0.0
        %538 = vmatpush1.msra.mxu0 0.0
        %539 = vmatprep.subr.mxu0 0.0
        %540 = vmatpush1.msra.mxu0 0.0
        %541 = vmatprep.subr.mxu0 0.0
        %542 = vmatpush1.msra.mxu0 0.0
        %543 = vmatprep.subr.mxu0 0.0
        %544 = vmatpush1.msra.mxu0 0.0
        %545 = vmatprep.subr.mxu0 0.0
        %546 = vmatpush1.msra.mxu0 0.0
        %547 = vmatprep.subr.mxu0 0.0
        %548 = vmatpush1.msra.mxu0 0.0
        %549 = vmatprep.subr.mxu0 0.0
        %550 = vmatpush1.msra.mxu0 0.0
        %551 = vmatprep.subr.mxu0 0.0
        %552 = vmatpush1.msra.mxu0 0.0
        %553 = vmatprep.subr.mxu0 0.0
        %554 = vmatpush1.msra.mxu0 0.0
        %555 = vmatprep.subr.mxu0 0.0
        %556 = vmatpush1.msra.mxu0 0.0
        %557 = vmatprep.subr.mxu0 0.0
        %558 = vmatpush1.msra.mxu0 0.0
        %559 = vmatprep.subr.mxu0 0.0
        %560 = vmatpush1.msra.mxu0 0.0
        %561 = vmatprep.subr.mxu0 0.0
        %562 = vmatpush1.msra.mxu0 0.0
        %563 = vmatprep.subr.mxu0 0.0
        %564 = vmatpush1.msra.mxu0 0.0
        %565 = vmatprep.subr.mxu0 0.0
        %566 = vmatpush1.msra.mxu0 0.0
        %567 = vmatprep.subr.mxu0 0.0
        %568 = vmatpush1.msra.mxu0 0.0
        %569 = vmatprep.subr.mxu0 0.0
        %570 = vmatpush1.msra.mxu0 0.0
        %571 = vmatprep.mubr.f32.mxu0 0.0
        %v572 = vand.u32 %v198, 4294901760
        %573 = vmatmul.mubr.f32.gmra.mrb[0].mxu0 %v572
        %v574 = vpop.f32.mrb[0].mxu0
        %v575 = vadd.f32 %v501, %v574
        %v576 = vpop.f32.mrb[0].mxu0
        %577 = vdwg.mxu0
        %578 = vmatprep.subr.mxu0 0.0
        %v579 = vand.u32 %v202, 4294901760
        %580 = vmatpush1.msra.mxu0 %v579
        %581 = vmatprep.subr.mxu0 0.0
        %582 = vmatpush1.msra.mxu0 0.0
        %583 = vmatprep.subr.mxu0 0.0
        %584 = vmatpush1.msra.mxu0 0.0
        %585 = vmatprep.subr.mxu0 0.0
        %586 = vmatpush1.msra.mxu0 0.0
        %587 = vmatprep.subr.mxu0 0.0
        %588 = vmatpush1.msra.mxu0 0.0
        %589 = vmatprep.subr.mxu0 0.0
        %590 = vmatpush1.msra.mxu0 0.0
        %591 = vmatprep.subr.mxu0 0.0
        %592 = vmatpush1.msra.mxu0 0.0
        %593 = vmatprep.subr.mxu0 0.0
        %594 = vmatpush1.msra.mxu0 0.0
        %595 = vmatprep.subr.mxu0 0.0
        %596 = vmatpush1.msra.mxu0 0.0
        %597 = vmatprep.subr.mxu0 0.0
        %598 = vmatpush1.msra.mxu0 0.0
        %599 = vmatprep.subr.mxu0 0.0
        %600 = vmatpush1.msra.mxu0 0.0
        %601 = vmatprep.subr.mxu0 0.0
        %602 = vmatpush1.msra.mxu0 0.0
        %603 = vmatprep.subr.mxu0 0.0
        %604 = vmatpush1.msra.mxu0 0.0
        %605 = vmatprep.subr.mxu0 0.0
        %606 = vmatpush1.msra.mxu0 0.0
        %607 = vmatprep.subr.mxu0 0.0
        %608 = vmatpush1.msra.mxu0 0.0
        %609 = vmatprep.subr.mxu0 0.0
        %610 = vmatpush1.msra.mxu0 0.0
        %611 = vmatprep.subr.mxu0 0.0
        %612 = vmatpush1.msra.mxu0 0.0
        %613 = vmatprep.subr.mxu0 0.0
        %614 = vmatpush1.msra.mxu0 0.0
        %615 = vmatprep.subr.mxu0 0.0
        %616 = vmatpush1.msra.mxu0 0.0
        %617 = vmatprep.subr.mxu0 0.0
        %618 = vmatpush1.msra.mxu0 0.0
        %619 = vmatprep.subr.mxu0 0.0
        %620 = vmatpush1.msra.mxu0 0.0
        %621 = vmatprep.subr.mxu0 0.0
        %622 = vmatpush1.msra.mxu0 0.0
        %623 = vmatprep.subr.mxu0 0.0
        %624 = vmatpush1.msra.mxu0 0.0
        %625 = vmatprep.subr.mxu0 0.0
        %626 = vmatpush1.msra.mxu0 0.0
        %627 = vmatprep.subr.mxu0 0.0
        %628 = vmatpush1.msra.mxu0 0.0
        %629 = vmatprep.subr.mxu0 0.0
        %630 = vmatpush1.msra.mxu0 0.0
        %631 = vmatprep.subr.mxu0 0.0
        %632 = vmatpush1.msra.mxu0 0.0
        %633 = vmatprep.subr.mxu0 0.0
        %634 = vmatpush1.msra.mxu0 0.0
        %635 = vmatprep.subr.mxu0 0.0
        %636 = vmatpush1.msra.mxu0 0.0
        %637 = vmatprep.subr.mxu0 0.0
        %638 = vmatpush1.msra.mxu0 0.0
        %639 = vmatprep.subr.mxu0 0.0
        %640 = vmatpush1.msra.mxu0 0.0
        %641 = vmatprep.subr.mxu0 0.0
        %642 = vmatpush1.msra.mxu0 0.0
        %643 = vmatprep.mubr.f32.mxu0 0.0
        %v644 = vand.u32 %v198, 4294901760
        %645 = vmatmul.mubr.f32.gmra.mrb[0].mxu0 %v644
        %v646 = vpop.f32.mrb[0].mxu0
        %v647 = vadd.f32 %v575, %v646
        %v648 = vpop.f32.mrb[0].mxu0
        %649 = vdwg.mxu0
        %650 = vst [vmem:[%s185] sm:$0xff] %v647
        %s651 = sand.u32 %s109, 1
        %s652 = scalar_lea.sflag [#allocation3], %s651
        %s653 = sand.u32 %s109, 1
        %s654 = smul.addr %s653, 8
        %s655 = scalar_lea.vmem [#allocation2], %s654
        // Predicated region
        $region33: #{tpu_custom_call.1} parent=31 // pred_check
          %p656 = pneg %p119
        $region34: #{tpu_custom_call.1} parent=31 // pred_check_branch
          %658 = sbr.rel (%p656) target = $region36
        $region35: #{tpu_custom_call.1} parent=31 // pred_region
          %s660 = ssub.s32 128, 128
          %661 = vsyncadd %s652, %s660
          %s662 = smul.addr %s21, 2
          %s663 = sadd.s32 %s22, %s662
          %s664 = smul.addr %s663, 128
          %s665 = scalar_lea.hbm %s3, %s664
          %s667 = sshll.u32 %s655, 4
          %s668 = int_to_ptr.vmem [resolvable:$true] %s667
          %670 = dma.vmem_to_hbm [thread:$0]  %s668, 128, %s665, %s652
        $region36: #{tpu_custom_call.1} parent=31 // pred_fallthru
          _
      $region32: #{tpu_custom_call.1} parent=5 // pred_fallthru
        _
      %p671 = scmp.le.s32.totalorder 2, %s12
      // Predicated region
      $region37: #{tpu_custom_call.1} parent=5 // pred_check
        %p672 = pneg %p671
      $region38: #{tpu_custom_call.1} parent=5 // pred_check_branch
        %674 = sbr.rel (%p672) target = $region40
      $region39: #{tpu_custom_call.1} parent=5 // pred_region
        %s675 = ssub.s32 %s12, 2
        // Predicated region
        $region41: #{tpu_custom_call.1} parent=39 // pred_check
          %p676 = pneg %p125
        $region42: #{tpu_custom_call.1} parent=39 // pred_check_branch
          %678 = sbr.rel (%p676) target = $region44
        $region43: #{tpu_custom_call.1} parent=39 // pred_region
          %s679 = sand.u32 %s110, 1
          %s680 = scalar_lea.sflag [#allocation3], %s679
          %s681 = sand.u32 %s110, 1
          %s682 = smul.addr %s681, 8
          %s683 = scalar_lea.vmem [#allocation2], %s682
          %684 = dma.done %s680, 128
        $region44: #{tpu_custom_call.1} parent=39 // pred_fallthru
          _
      $region40: #{tpu_custom_call.1} parent=5 // pred_fallthru
        _
    $region6: #{tpu_custom_call.1} parent=1 // loop_footer
      %s16 = sadd.s32 1, %s12
    $region7: #{tpu_custom_call.1} parent=1 // loop_footer_branch
      %11 = sbr.rel target = $region3
    $region8: #{tpu_custom_call.1} parent=1 // loop_exit
      _
    %685 = vsyncpa [#allocation3], 1
    %s686 = scalar_lea.sflag [#allocation3], 1
    %687 = vsyncpa %s686, 1

</llo_original>
